<compile_context>
chip_gen: v6e
topology: v6e:2x2x1
jax: 0.10.0
libtpu: 0.0.40
codegen_flags: <defaults>
</compile_context>

<pallas_src>
import jax
import jax.numpy as jnp
from jax.experimental import pallas as pl
from jax.experimental.pallas import tpu as pltpu


def _convT1x1_silu_kernel(x_ref, w_ref, b_ref, o_ref):
    # x_ref: (Cin, HW) bf16   w_ref: (Cout, Cin) bf16
    # b_ref: (Cout, 1) f32    o_ref: (Cout, HW) f32
    y = jnp.dot(w_ref[...], x_ref[...], preferred_element_type=jnp.float32)
    y = y + b_ref[...]                              # f32 bias, broadcast over lanes
    o_ref[...] = (y * jax.nn.sigmoid(y)).astype(o_ref.dtype)   # SiLU in f32


def init_params(weight, bias):
    """One-time parameter prep, hoisted out of the forward path.

    weight: (Cin, Cout, 1, 1) PyTorch ConvTranspose2d layout; bias: (Cout,).
    Returns W^T as (Cout, Cin) bf16 and bias as an f32 (Cout, 1) column.
    """
    w_t = jnp.transpose(weight[:, :, 0, 0]).astype(jnp.bfloat16)   # (Cout, Cin)
    b_col = bias.reshape(-1, 1).astype(jnp.float32)                # (Cout, 1)
    return w_t, b_col


def conv_transpose_1x1_silu(x_nchw, w_t_bf16, b_col):
    """x_nchw: (N, Cin, H, W) f32; w_t_bf16: (Cout, Cin) bf16; b_col: (Cout, 1) f32."""
    n, cin, h, w = x_nchw.shape
    cout = w_t_bf16.shape[0]
    hw = h * w

    # Channel-major pure view + bf16 operand (halves the dominant HBM read).
    x_cm = x_nchw.reshape(n, cin, hw).astype(jnp.bfloat16)

    cost = pl.CostEstimate(
        flops=int(2 * n * hw * cin * cout),
        transcendentals=int(n * cout * hw),          # sigmoid exp per output element
        bytes_accessed=int(x_cm.size * 2 + w_t_bf16.size * 2
                           + b_col.size * 4 + n * cout * hw * 4),
    )

    out_cm = pl.pallas_call(
        _convT1x1_silu_kernel,
        out_shape=jax.ShapeDtypeStruct((n, cout, hw), x_nchw.dtype),
        grid=(n,),
        in_specs=[
            # Batch dim squeezed out of the kernel view; one full (Cin, HW) tile.
            pl.BlockSpec((None, cin, hw), lambda nb: (nb, 0, 0)),
            # Constant across grid steps -> single-buffered.
            pl.BlockSpec((cout, cin), lambda nb: (0, 0),
                         pipeline_mode=pl.Buffered(1)),
            pl.BlockSpec((cout, 1), lambda nb: (0, 0),
                         pipeline_mode=pl.Buffered(1)),
        ],
        out_specs=pl.BlockSpec((None, cout, hw), lambda nb: (nb, 0, 0)),
        compiler_params=pltpu.CompilerParams(
            dimension_semantics=("parallel",)),
        cost_estimate=cost,
    )(x_cm, w_t_bf16, b_col)

    # (N, Cout, H*W) -> (N, Cout, H, W): pure view, no transpose.
    return out_cm.reshape(n, cout, h, w)


def reference(x_nchw, weight, bias):
    # Pure-JAX f32 reference of the module's math.
    y = (jnp.einsum("nchw,co->nohw", x_nchw, weight[:, :, 0, 0])
         + bias[None, :, None, None])
    return y * jax.nn.sigmoid(y)


if __name__ == "__main__":
    key = jax.random.PRNGKey(0)
    k_x, k_w, k_b = jax.random.split(key, 3)

    N, C, H, W = 1, 154, 22, 22  # matches the module's expected input
    x1 = jax.random.normal(k_x, (N, C, H, W), dtype=jnp.float32)

    # Deterministic parameter init (mimics PyTorch uniform bound 1/sqrt(fan_in)).
    bound = 1.0 / jnp.sqrt(jnp.float32(C * 1 * 1))
    weight = jax.random.uniform(k_w, (C, C, 1, 1), minval=-bound, maxval=bound,
                                dtype=jnp.float32)
    bias = jax.random.uniform(k_b, (C,), minval=-bound, maxval=bound,
                              dtype=jnp.float32)

    # One-time parameter prep (hoisted out of the per-call path).
    w_t_bf16, b_col = init_params(weight, bias)
    w_t_bf16 = jax.block_until_ready(w_t_bf16)

    out = conv_transpose_1x1_silu(x1, w_t_bf16, b_col)
    out = jax.block_until_ready(out)

    ref = jax.block_until_ready(reference(x1, weight, bias))
    assert out.shape == (N, C, H, W)
    # bf16 MXU operands vs full-f32 reference: tolerance loosened accordingly.
    err = float(jnp.max(jnp.abs(out - ref)))
    assert jnp.allclose(out, ref, atol=2e-2, rtol=2e-2), f"max abs err {err}"

    print("KERNEL_OK")
</pallas_src>

<mosaic_0001>
module attributes {stable_mosaic.version = 11 : i64} {
  func.func @_convT1x1_silu_kernel(%arg0: i32, %arg1: memref<1x154x484xbf16, #tpu.memory_space<vmem>>, %arg2: memref<154x154xbf16, #tpu.memory_space<vmem>>, %arg3: memref<154x1xf32, #tpu.memory_space<vmem>>, %arg4: memref<1x154x484xf32, #tpu.memory_space<vmem>>) attributes {dimension_semantics = [#tpu.dimension_semantics<parallel>], iteration_bounds = array<i64: 1>, scalar_prefetch = 0 : i64, scratch_operands = 0 : i64, tpu.core_type = #tpu.core_type<tc>, window_params = [{transform_indices = @transform_0, window_bounds = array<i64: 1, 154, 484>}, {pipeline_mode = #tpu.pipeline_mode<synchronous>, transform_indices = @transform_1, window_bounds = array<i64: 154, 154>}, {pipeline_mode = #tpu.pipeline_mode<synchronous>, transform_indices = @transform_2, window_bounds = array<i64: 154, 1>}, {transform_indices = @transform_3, window_bounds = array<i64: 1, 154, 484>}]} {
    %c0 = arith.constant 0 : index
    %c0_0 = arith.constant 0 : index
    %0 = vector.load %arg2[%c0, %c0_0] : memref<154x154xbf16, #tpu.memory_space<vmem>>, vector<154x154xbf16>
    %c0_1 = arith.constant 0 : index
    %c0_2 = arith.constant 0 : index
    %c0_3 = arith.constant 0 : index
    %1 = vector.load %arg1[%c0_1, %c0_2, %c0_3] : memref<1x154x484xbf16, #tpu.memory_space<vmem>>, vector<1x154x484xbf16>
    %2 = vector.shape_cast %1 : vector<1x154x484xbf16> to vector<154x484xbf16>
    %cst = arith.constant dense<0.000000e+00> : vector<154x484xf32>
    %3 = tpu.matmul %0, %2, %cst {dimension_numbers = #tpu.dot_dimension_numbers<[1], [0], [0], [1], [0, 0, 1, 1], [], []>} : vector<154x154xbf16>, vector<154x484xbf16>, vector<154x484xf32> -> vector<154x484xf32>
    %c0_4 = arith.constant 0 : index
    %c0_5 = arith.constant 0 : index
    %4 = vector.load %arg3[%c0_4, %c0_5] : memref<154x1xf32, #tpu.memory_space<vmem>>, vector<154x1xf32>
    %5 = vector.broadcast %4 : vector<154x1xf32> to vector<154x484xf32>
    %6 = arith.addf %3, %5 : vector<154x484xf32>
    %7 = arith.negf %6 : vector<154x484xf32>
    %8 = math.exp %7 : vector<154x484xf32>
    %cst_6 = arith.constant 1.000000e+00 : f32
    %9 = vector.broadcast %cst_6 : f32 to vector<154x484xf32>
    %10 = arith.addf %9, %8 : vector<154x484xf32>
    %11 = arith.divf %9, %10 : vector<154x484xf32>
    %12 = arith.mulf %6, %11 : vector<154x484xf32>
    %c0_7 = arith.constant 0 : index
    %c0_8 = arith.constant 0 : index
    %c0_9 = arith.constant 0 : index
    %13 = vector.load %arg4[%c0_7, %c0_8, %c0_9] : memref<1x154x484xf32, #tpu.memory_space<vmem>>, vector<1x154x484xf32>
    %14 = vector.shape_cast %13 : vector<1x154x484xf32> to vector<154x484xf32>
    %15 = vector.shape_cast %12 : vector<154x484xf32> to vector<1x154x484xf32>
    tpu.vector_store %arg4[%c0_7, %c0_8, %c0_9], %15 {strides = array<i32>} : memref<1x154x484xf32, #tpu.memory_space<vmem>>, vector<1x154x484xf32>,
    return
  }
  func.func @transform_0(%arg0: i32) -> (i32, i32, i32) {
    %c0_i32 = arith.constant 0 : i32
    %c0_i32_0 = arith.constant 0 : i32
    %c0_i32_1 = arith.constant 0 : i32
    return %arg0, %c0_i32, %c0_i32_0 : i32, i32, i32
  }
  func.func @transform_1(%arg0: i32) -> (i32, i32) {
    %c0_i32 = arith.constant 0 : i32
    %c0_i32_0 = arith.constant 0 : i32
    %c0_i32_1 = arith.constant 0 : i32
    return %c0_i32, %c0_i32_0 : i32, i32
  }
  func.func @transform_2(%arg0: i32) -> (i32, i32) {
    %c0_i32 = arith.constant 0 : i32
    %c0_i32_0 = arith.constant 0 : i32
    %c0_i32_1 = arith.constant 0 : i32
    return %c0_i32, %c0_i32_0 : i32, i32
  }
  func.func @transform_3(%arg0: i32) -> (i32, i32, i32) {
    %c0_i32 = arith.constant 0 : i32
    %c0_i32_0 = arith.constant 0 : i32
    %c0_i32_1 = arith.constant 0 : i32
    return %arg0, %c0_i32, %c0_i32_0 : i32, i32, i32
  }
}

</mosaic_0001>

<llo_original>
// kernel: tpu_custom_call.1
$region0: #{tpu_custom_call.1}
  #allocation0 [shape = 'u32[]', space=smem, size = 0x4, offset = 0x4, fixed_abs, tag = 'smem constant byte address 0x4 - core index']
  #allocation1 [shape = 'u32[144,128]{1,0:T(1,128)}', space=vmem, size = 0x12000, scoped, tag = 'internal scratch']
  %s0 = inlined_call_operand.hbm [shape: bf16[1,154,484], index: 0, kind: input, shape index: {}]
  %s1 = inlined_call_operand.vmem [shape: bf16[154,154], index: 1, kind: input, shape index: {}]
  %s2 = inlined_call_operand.vmem [shape: f32[154,1], index: 2, kind: input, shape index: {}]
  %s3 = inlined_call_operand.vmem [shape: f32[1,154,484], index: 3, kind: output, shape index: {}]
  %s4 = sld [smem:[#allocation0]]
  $region26: #{tpu_custom_call.1} parent=0
    _
  %s6 = ssub.s32 1, %s4
  %s7 = scalar_select 0, %s6, %s4
  $region1: #{tpu_custom_call.1} parent=0
    #allocation2 [shape = 'u8[163840]{0}', space=vmem, size = 0x28000, scoped, tag = 'input window, operand 0, single buffered']
    #allocation3 [shape = 's32[1]{0}', space=sflag, size = 0x4, scoped, tag = 'scoped memory for tpu_custom_call.1']
    %8 = vsyncpa [#allocation3], 0
    // Predicated region
    $region2: #{tpu_custom_call.1} parent=1 // pred_check
      _
    $region3: #{tpu_custom_call.1} parent=1 // pred_check_branch
      %10 = sbr.rel (0) target = $region5
    $region4: #{tpu_custom_call.1} parent=1 // pred_region
      %s12 = ssub.s32 5120, 5120
      %13 = vsyncadd [#allocation3], %s12
      %s14 = sshll.u32 [#allocation2], 4
      %s15 = int_to_ptr.vmem [resolvable:$true] %s14
      %20 = dma.hbm_to_vmem [thread:$0]  %s0, 5120, %s15, [#allocation3], 256, 256, 16
    $region5: #{tpu_custom_call.1} parent=1 // pred_fallthru
      _
    // Predicated region
    $region6: #{tpu_custom_call.1} parent=1 // pred_check
      _
    $region7: #{tpu_custom_call.1} parent=1 // pred_check_branch
      %22 = sbr.rel (0) target = $region9
    $region8: #{tpu_custom_call.1} parent=1 // pred_region
      _
    $region9: #{tpu_custom_call.1} parent=1 // pred_fallthru
      _
    // Predicated region
    $region10: #{tpu_custom_call.1} parent=1 // pred_check
      _
    $region11: #{tpu_custom_call.1} parent=1 // pred_check_branch
      %24 = sbr.rel (0) target = $region13
    $region12: #{tpu_custom_call.1} parent=1 // pred_region
      _
    $region13: #{tpu_custom_call.1} parent=1 // pred_fallthru
      _
    // Predicated region
    $region14: #{tpu_custom_call.1} parent=1 // pred_check
      _
    $region15: #{tpu_custom_call.1} parent=1 // pred_check_branch
      %26 = sbr.rel (0) target = $region17
    $region16: #{tpu_custom_call.1} parent=1 // pred_region
      %27 = dma.done [#allocation3], 5120
    $region17: #{tpu_custom_call.1} parent=1 // pred_fallthru
      _
    %v29 = vld [vmem:[%s1] sm:$0xff]
    %v30 = vld [vmem:[%s1 + $0x8] sm:$0xff]
    %v31 = vld [vmem:[%s1 + $0x10] sm:$0xff]
    %v32 = vld [vmem:[%s1 + $0x18] sm:$0xff]
    %v33 = vld [vmem:[%s1 + $0x20] sm:$0xff]
    %v34 = vld [vmem:[%s1 + $0x28] sm:$0xff]
    %v35 = vld [vmem:[%s1 + $0x30] sm:$0xff]
    %v36 = vld [vmem:[%s1 + $0x38] sm:$0xff]
    %v37 = vld [vmem:[%s1 + $0x40] sm:$0xff]
    %v38 = vld [vmem:[%s1 + $0x48] sm:$0xff]
    %v39 = vld [vmem:[%s1 + $0x50] sm:$0xff]
    %v40 = vld [vmem:[%s1 + $0x58] sm:$0xff]
    %v41 = vld [vmem:[%s1 + $0x60] sm:$0xff]
    %v42 = vld [vmem:[%s1 + $0x68] sm:$0xff]
    %v43 = vld [vmem:[%s1 + $0x70] sm:$0xff]
    %v44 = vld [vmem:[%s1 + $0x78] sm:$0xff]
    %v45 = vld [vmem:[%s1 + $0x80] sm:$0xff]
    %v46 = vld [vmem:[%s1 + $0x88] sm:$0xff]
    %v47 = vld [vmem:[%s1 + $0x90] sm:$0xff]
    %v48 = vld [vmem:[%s1 + $0x98] sm:$0x11]
    %v49 = vld [vmem:[#allocation2] sm:$0xff]
    %v50 = vld [vmem:[#allocation2 + $0x8] sm:$0xff]
    %v51 = vld [vmem:[#allocation2 + $0x10] sm:$0xff]
    %v52 = vld [vmem:[#allocation2 + $0x18] sm:$0xff]
    %v53 = vld [vmem:[#allocation2 + $0x20] sm:$0xff]
    %v54 = vld [vmem:[#allocation2 + $0x28] sm:$0xff]
    %v55 = vld [vmem:[#allocation2 + $0x30] sm:$0xff]
    %v56 = vld [vmem:[#allocation2 + $0x38] sm:$0xff]
    %v57 = vld [vmem:[#allocation2 + $0x40] sm:$0xff]
    %v58 = vld [vmem:[#allocation2 + $0x48] sm:$0xff]
    %v59 = vld [vmem:[#allocation2 + $0x50] sm:$0xff]
    %v60 = vld [vmem:[#allocation2 + $0x58] sm:$0xff]
    %v61 = vld [vmem:[#allocation2 + $0x60] sm:$0xff]
    %v62 = vld [vmem:[#allocation2 + $0x68] sm:$0xff]
    %v63 = vld [vmem:[#allocation2 + $0x70] sm:$0xff]
    %v64 = vld [vmem:[#allocation2 + $0x78] sm:$0xff]
    %v65 = vld [vmem:[#allocation2 + $0x80] sm:$0xff]
    %v66 = vld [vmem:[#allocation2 + $0x88] sm:$0xff]
    %v67 = vld [vmem:[#allocation2 + $0x90] sm:$0xff]
    %v68 = vld [vmem:[#allocation2 + $0x98] sm:$0xff]
    %v69 = vld [vmem:[#allocation2 + $0xa0] sm:$0xff]
    %v70 = vld [vmem:[#allocation2 + $0xa8] sm:$0xff]
    %v71 = vld [vmem:[#allocation2 + $0xb0] sm:$0xff]
    %v72 = vld [vmem:[#allocation2 + $0xb8] sm:$0xff]
    %v73 = vld [vmem:[#allocation2 + $0xc0] sm:$0xff]
    %v74 = vld [vmem:[#allocation2 + $0xc8] sm:$0xff]
    %v75 = vld [vmem:[#allocation2 + $0xd0] sm:$0xff]
    %v76 = vld [vmem:[#allocation2 + $0xd8] sm:$0xff]
    %v77 = vld [vmem:[#allocation2 + $0xe0] sm:$0xff]
    %v78 = vld [vmem:[#allocation2 + $0xe8] sm:$0xff]
    %v79 = vld [vmem:[#allocation2 + $0xf0] sm:$0xff]
    %v80 = vld [vmem:[#allocation2 + $0xf8] sm:$0xff]
    %v81 = vld [vmem:[#allocation2 + $0x100] sm:$0xff]
    %v82 = vld [vmem:[#allocation2 + $0x108] sm:$0xff]
    %v83 = vld [vmem:[#allocation2 + $0x110] sm:$0xff]
    %v84 = vld [vmem:[#allocation2 + $0x118] sm:$0xff]
    %v85 = vld [vmem:[#allocation2 + $0x120] sm:$0xff]
    %v86 = vld [vmem:[#allocation2 + $0x128] sm:$0xff]
    %v87 = vld [vmem:[#allocation2 + $0x130] sm:$0x11]
    %v88 = vld [vmem:[#allocation2 + $0x138] sm:$0x11]
    %v89 = vld [vmem:[%s2] sm:$0xff]
    %v90 = vld [vmem:[%s2 + $0x8] sm:$0xff]
    %v91 = vld [vmem:[%s2 + $0x10] sm:$0xff]
    %v92 = vld [vmem:[%s2 + $0x18] sm:$0xff]
    %v93 = vld [vmem:[%s2 + $0x20] sm:$0xff]
    %v94 = vld [vmem:[%s2 + $0x28] sm:$0xff]
    %v95 = vld [vmem:[%s2 + $0x30] sm:$0xff]
    %v96 = vld [vmem:[%s2 + $0x38] sm:$0xff]
    %v97 = vld [vmem:[%s2 + $0x40] sm:$0xff]
    %v98 = vld [vmem:[%s2 + $0x48] sm:$0xff]
    %v99 = vld [vmem:[%s2 + $0x50] sm:$0xff]
    %v100 = vld [vmem:[%s2 + $0x58] sm:$0xff]
    %v101 = vld [vmem:[%s2 + $0x60] sm:$0xff]
    %v102 = vld [vmem:[%s2 + $0x68] sm:$0xff]
    %v103 = vld [vmem:[%s2 + $0x70] sm:$0xff]
    %v104 = vld [vmem:[%s2 + $0x78] sm:$0xff]
    %v105 = vld [vmem:[%s2 + $0x80] sm:$0xff]
    %v106 = vld [vmem:[%s2 + $0x88] sm:$0xff]
    %v107 = vld [vmem:[%s2 + $0x90] sm:$0xff]
    %v108 = vld [vmem:[%s2 + $0x98] sm:$0x3]
    %110 = vset.pattern.permute.xlu0 0
    %111 = vperm.xlu0 %110, %v89
    %v112 = vpop.permute.xlu0 %111
    %115 = vset.pattern.permute.xlu0 0
    %116 = vperm.xlu0 %115, %v90
    %v117 = vpop.permute.xlu0 %116
    %120 = vset.pattern.permute.xlu0 0
    %121 = vperm.xlu0 %120, %v91
    %v122 = vpop.permute.xlu0 %121
    %125 = vset.pattern.permute.xlu0 0
    %126 = vperm.xlu0 %125, %v92
    %v127 = vpop.permute.xlu0 %126
    %130 = vset.pattern.permute.xlu0 0
    %131 = vperm.xlu0 %130, %v93
    %v132 = vpop.permute.xlu0 %131
    %135 = vset.pattern.permute.xlu0 0
    %136 = vperm.xlu0 %135, %v94
    %v137 = vpop.permute.xlu0 %136
    %140 = vset.pattern.permute.xlu0 0
    %141 = vperm.xlu0 %140, %v95
    %v142 = vpop.permute.xlu0 %141
    %145 = vset.pattern.permute.xlu0 0
    %146 = vperm.xlu0 %145, %v96
    %v147 = vpop.permute.xlu0 %146
    %150 = vset.pattern.permute.xlu0 0
    %151 = vperm.xlu0 %150, %v97
    %v152 = vpop.permute.xlu0 %151
    %155 = vset.pattern.permute.xlu0 0
    %156 = vperm.xlu0 %155, %v98
    %v157 = vpop.permute.xlu0 %156
    %160 = vset.pattern.permute.xlu0 0
    %161 = vperm.xlu0 %160, %v99
    %v162 = vpop.permute.xlu0 %161
    %165 = vset.pattern.permute.xlu0 0
    %166 = vperm.xlu0 %165, %v100
    %v167 = vpop.permute.xlu0 %166
    %170 = vset.pattern.permute.xlu0 0
    %171 = vperm.xlu0 %170, %v101
    %v172 = vpop.permute.xlu0 %171
    %175 = vset.pattern.permute.xlu0 0
    %176 = vperm.xlu0 %175, %v102
    %v177 = vpop.permute.xlu0 %176
    %180 = vset.pattern.permute.xlu0 0
    %181 = vperm.xlu0 %180, %v103
    %v182 = vpop.permute.xlu0 %181
    %185 = vset.pattern.permute.xlu0 0
    %186 = vperm.xlu0 %185, %v104
    %v187 = vpop.permute.xlu0 %186
    %190 = vset.pattern.permute.xlu0 0
    %191 = vperm.xlu0 %190, %v105
    %v192 = vpop.permute.xlu0 %191
    %195 = vset.pattern.permute.xlu0 0
    %196 = vperm.xlu0 %195, %v106
    %v197 = vpop.permute.xlu0 %196
    %200 = vset.pattern.permute.xlu0 0
    %201 = vperm.xlu0 %200, %v107
    %v202 = vpop.permute.xlu0 %201
    %205 = vset.pattern.permute.xlu0 0
    %206 = vperm.xlu0 %205, %v108
    %v207 = vpop.permute.xlu0 %206
    %v229 = vunpack.c.l.b16 %v29
    %v230 = vunpack.c.h.b16 %v29
    %v231 = vunpack.c.l.b16 %v30
    %v232 = vunpack.c.h.b16 %v30
    %v233 = vunpack.c.l.b16 %v31
    %v234 = vunpack.c.h.b16 %v31
    %v235 = vunpack.c.l.b16 %v32
    %v236 = vunpack.c.h.b16 %v32
    %v237 = vunpack.c.l.b16 %v33
    %v238 = vunpack.c.h.b16 %v33
    %v239 = vunpack.c.l.b16 %v34
    %v240 = vunpack.c.h.b16 %v34
    %v241 = vunpack.c.l.b16 %v35
    %v242 = vunpack.c.h.b16 %v35
    %v243 = vunpack.c.l.b16 %v36
    %v244 = vunpack.c.h.b16 %v36
    %v245 = vunpack.c.l.b16 %v37
    %v246 = vunpack.c.h.b16 %v37
    %v247 = vunpack.c.l.b16 %v38
    %v248 = vunpack.c.h.b16 %v38
    %v249 = vunpack.c.l.b16 %v39
    %v250 = vunpack.c.h.b16 %v39
    %v251 = vunpack.c.l.b16 %v40
    %v252 = vunpack.c.h.b16 %v40
    %v253 = vunpack.c.l.b16 %v41
    %v254 = vunpack.c.h.b16 %v41
    %v255 = vunpack.c.l.b16 %v42
    %v256 = vunpack.c.h.b16 %v42
    %v257 = vunpack.c.l.b16 %v43
    %v258 = vunpack.c.h.b16 %v43
    %v259 = vunpack.c.l.b16 %v44
    %v260 = vunpack.c.h.b16 %v44
    %v261 = vunpack.c.l.b16 %v45
    %v262 = vunpack.c.h.b16 %v45
    %v263 = vunpack.c.l.b16 %v46
    %v264 = vunpack.c.h.b16 %v46
    %v265 = vunpack.c.l.b16 %v47
    %v266 = vunpack.c.h.b16 %v47
    %v267 = vunpack.c.l.b16 %v48
    %v268 = vunpack.c.h.b16 %v48
    %v269 = vpack.c.b16 %v231, %v229
    %v270 = vpack.c.b16 %v232, %v230
    %v271 = vpack.c.b16 %v235, %v233
    %v272 = vpack.c.b16 %v236, %v234
    %v273 = vpack.c.b16 %v239, %v237
    %v274 = vpack.c.b16 %v240, %v238
    %v275 = vpack.c.b16 %v243, %v241
    %v276 = vpack.c.b16 %v244, %v242
    %v277 = vpack.c.b16 %v247, %v245
    %v278 = vpack.c.b16 %v248, %v246
    %v279 = vpack.c.b16 %v251, %v249
    %v280 = vpack.c.b16 %v252, %v250
    %v281 = vpack.c.b16 %v255, %v253
    %v282 = vpack.c.b16 %v256, %v254
    %v283 = vpack.c.b16 %v259, %v257
    %v284 = vpack.c.b16 %v260, %v258
    %v285 = vpack.c.b16 %v263, %v261
    %v286 = vpack.c.b16 %v264, %v262
    %v287 = vpack.c.b16 %v267, %v265
    %v288 = vpack.c.b16 %v268, %v266
    %v339 = vunpack.c.l.b16 %v49
    %v340 = vunpack.c.h.b16 %v49
    %v341 = vunpack.c.l.b16 %v50
    %v342 = vunpack.c.h.b16 %v50
    %v343 = vunpack.c.l.b16 %v51
    %v344 = vunpack.c.h.b16 %v51
    %v345 = vunpack.c.l.b16 %v52
    %v346 = vunpack.c.h.b16 %v52
    %v347 = vunpack.c.l.b16 %v53
    %v348 = vunpack.c.h.b16 %v53
    %v349 = vunpack.c.l.b16 %v54
    %v350 = vunpack.c.h.b16 %v54
    %v351 = vunpack.c.l.b16 %v55
    %v352 = vunpack.c.h.b16 %v55
    %v353 = vunpack.c.l.b16 %v56
    %v354 = vunpack.c.h.b16 %v56
    %v355 = vunpack.c.l.b16 %v57
    %v356 = vunpack.c.h.b16 %v57
    %v357 = vunpack.c.l.b16 %v58
    %v358 = vunpack.c.h.b16 %v58
    %v359 = vunpack.c.l.b16 %v59
    %v360 = vunpack.c.h.b16 %v59
    %v361 = vunpack.c.l.b16 %v60
    %v362 = vunpack.c.h.b16 %v60
    %v363 = vunpack.c.l.b16 %v61
    %v364 = vunpack.c.h.b16 %v61
    %v365 = vunpack.c.l.b16 %v62
    %v366 = vunpack.c.h.b16 %v62
    %v367 = vunpack.c.l.b16 %v63
    %v368 = vunpack.c.h.b16 %v63
    %v369 = vunpack.c.l.b16 %v64
    %v370 = vunpack.c.h.b16 %v64
    %v371 = vunpack.c.l.b16 %v65
    %v372 = vunpack.c.h.b16 %v65
    %v373 = vunpack.c.l.b16 %v66
    %v374 = vunpack.c.h.b16 %v66
    %v375 = vunpack.c.l.b16 %v67
    %v376 = vunpack.c.h.b16 %v67
    %v377 = vunpack.c.l.b16 %v68
    %v378 = vunpack.c.h.b16 %v68
    %v379 = vunpack.c.l.b16 %v69
    %v380 = vunpack.c.h.b16 %v69
    %v381 = vunpack.c.l.b16 %v70
    %v382 = vunpack.c.h.b16 %v70
    %v383 = vunpack.c.l.b16 %v71
    %v384 = vunpack.c.h.b16 %v71
    %v385 = vunpack.c.l.b16 %v72
    %v386 = vunpack.c.h.b16 %v72
    %v387 = vunpack.c.l.b16 %v73
    %v388 = vunpack.c.h.b16 %v73
    %v389 = vunpack.c.l.b16 %v74
    %v390 = vunpack.c.h.b16 %v74
    %v391 = vunpack.c.l.b16 %v75
    %v392 = vunpack.c.h.b16 %v75
    %v393 = vunpack.c.l.b16 %v76
    %v394 = vunpack.c.h.b16 %v76
    %v395 = vunpack.c.l.b16 %v77
    %v396 = vunpack.c.h.b16 %v77
    %v397 = vunpack.c.l.b16 %v78
    %v398 = vunpack.c.h.b16 %v78
    %v399 = vunpack.c.l.b16 %v79
    %v400 = vunpack.c.h.b16 %v79
    %v401 = vunpack.c.l.b16 %v80
    %v402 = vunpack.c.h.b16 %v80
    %v403 = vunpack.c.l.b16 %v81
    %v404 = vunpack.c.h.b16 %v81
    %v405 = vunpack.c.l.b16 %v82
    %v406 = vunpack.c.h.b16 %v82
    %v407 = vunpack.c.l.b16 %v83
    %v408 = vunpack.c.h.b16 %v83
    %v409 = vunpack.c.l.b16 %v84
    %v410 = vunpack.c.h.b16 %v84
    %v411 = vunpack.c.l.b16 %v85
    %v412 = vunpack.c.h.b16 %v85
    %v413 = vunpack.c.l.b16 %v86
    %v414 = vunpack.c.h.b16 %v86
    %v415 = vunpack.c.l.b16 %v87
    %v416 = vunpack.c.h.b16 %v87
    %v417 = vunpack.c.l.b16 %v88
    %v418 = vunpack.c.h.b16 %v88
    %v419 = vpack.c.b16 %v343, %v339
    %v420 = vpack.c.b16 %v344, %v340
    %v421 = vpack.c.b16 %v345, %v341
    %v422 = vpack.c.b16 %v346, %v342
    %v423 = vpack.c.b16 %v351, %v347
    %v424 = vpack.c.b16 %v352, %v348
    %v425 = vpack.c.b16 %v353, %v349
    %v426 = vpack.c.b16 %v354, %v350
    %v427 = vpack.c.b16 %v359, %v355
    %v428 = vpack.c.b16 %v360, %v356
    %v429 = vpack.c.b16 %v361, %v357
    %v430 = vpack.c.b16 %v362, %v358
    %v431 = vpack.c.b16 %v367, %v363
    %v432 = vpack.c.b16 %v368, %v364
    %v433 = vpack.c.b16 %v369, %v365
    %v434 = vpack.c.b16 %v370, %v366
    %v435 = vpack.c.b16 %v375, %v371
    %v436 = vpack.c.b16 %v376, %v372
    %v437 = vpack.c.b16 %v377, %v373
    %v438 = vpack.c.b16 %v378, %v374
    %v439 = vpack.c.b16 %v383, %v379
    %v440 = vpack.c.b16 %v384, %v380
    %v441 = vpack.c.b16 %v385, %v381
    %v442 = vpack.c.b16 %v386, %v382
    %v443 = vpack.c.b16 %v391, %v387
    %v444 = vpack.c.b16 %v392, %v388
    %v445 = vpack.c.b16 %v393, %v389
    %v446 = vpack.c.b16 %v394, %v390
    %v447 = vpack.c.b16 %v399, %v395
    %v448 = vpack.c.b16 %v400, %v396
    %v449 = vpack.c.b16 %v401, %v397
    %v450 = vpack.c.b16 %v402, %v398
    %v451 = vpack.c.b16 %v407, %v403
    %v452 = vpack.c.b16 %v408, %v404
    %v453 = vpack.c.b16 %v409, %v405
    %v454 = vpack.c.b16 %v410, %v406
    %v455 = vpack.c.b16 %v415, %v411
    %v456 = vpack.c.b16 %v416, %v412
    %v457 = vpack.c.b16 %v417, %v413
    %v458 = vpack.c.b16 %v418, %v414
    %vm495 = vcmask 211968
    %v497 = vsel %vm495, %v270, 0
    %v500 = vsel %vm495, %v272, 0
    %v503 = vsel %vm495, %v274, 0
    %v506 = vsel %vm495, %v276, 0
    %v509 = vsel %vm495, %v278, 0
    %v512 = vsel %vm495, %v280, 0
    %v515 = vsel %vm495, %v282, 0
    %v518 = vsel %vm495, %v284, 0
    %v521 = vsel %vm495, %v286, 0
    %v524 = vsel %vm495, %v288, 0
    %vm526 = vcmask 1044480
    %v528 = vsel %vm526, %v455, 0
    %v531 = vsel %vm526, %v456, 0
    %v534 = vsel %vm526, %v457, 0
    %v537 = vsel %vm526, %v458, 0
    %539 = vmatprep.subr.bf16.mxu0 %v448
    %540 = vmatpush1.bf16.msra.mxu0 %v447
    %541 = vmatprep.subr.bf16.mxu0 %v444
    %542 = vmatpush1.bf16.msra.mxu0 %v443
    %543 = vmatprep.subr.bf16.mxu0 %v440
    %544 = vmatpush1.bf16.msra.mxu0 %v439
    %545 = vmatprep.subr.bf16.mxu0 %v436
    %546 = vmatpush1.bf16.msra.mxu0 %v435
    %547 = vmatprep.subr.bf16.mxu0 %v432
    %548 = vmatpush1.bf16.msra.mxu0 %v431
    %549 = vmatprep.subr.bf16.mxu0 %v428
    %550 = vmatpush1.bf16.msra.mxu0 %v427
    %551 = vmatprep.subr.bf16.mxu0 %v424
    %552 = vmatpush1.bf16.msra.mxu0 %v423
    %553 = vmatprep.subr.bf16.mxu0 %v420
    %554 = vmatpush1.bf16.msra.mxu0 %v419
    %555 = vmatprep.subr.bf16.mxu0 0
    %556 = vmatpush2.bf16.msra.mxu0 0
    %557 = vmatprep.subr.bf16.mxu0 0
    %558 = vmatpush2.bf16.msra.mxu0 0
    %559 = vmatprep.subr.bf16.mxu0 0
    %560 = vmatpush2.bf16.msra.mxu0 0
    %561 = vmatprep.subr.bf16.mxu0 0
    %562 = vmatpush2.bf16.msra.mxu0 0
    %563 = vmatprep.subr.bf16.mxu0 0
    %564 = vmatpush2.bf16.msra.mxu0 0
    %565 = vmatprep.subr.bf16.mxu0 0
    %566 = vmatpush2.bf16.msra.mxu0 0
    %567 = vmatprep.subr.bf16.mxu0 %v531
    %568 = vmatpush2.bf16.msra.mxu0 %v528
    %569 = vmatprep.subr.bf16.mxu0 %v452
    %570 = vmatpush2.bf16.msra.mxu0 %v451
    %571 = vmatprep.mubr.bf16.mxu0 %v497
    %572 = vmatmul.mubr.bf16.gmra.mxu0 %v269
    %v573 = vpop.f32.mrf.mxu0
    %v574 = vadd.f32 %v112, %v573
    %v575 = vpop.f32.mrf.mxu0
    %v576 = vadd.f32 %v112, %v575
    %v577 = vpop.f32.mrf.mxu0
    %v578 = vadd.f32 %v117, %v577
    %v579 = vpop.f32.mrf.mxu0
    %v580 = vadd.f32 %v117, %v579
    %581 = vmatprep.mubr.bf16.mxu0 %v500
    %582 = vmatmul.mubr.bf16.gmra.mxu0 %v271
    %v583 = vpop.f32.mrf.mxu0
    %v584 = vadd.f32 %v122, %v583
    %v585 = vpop.f32.mrf.mxu0
    %v586 = vadd.f32 %v122, %v585
    %v587 = vpop.f32.mrf.mxu0
    %v588 = vadd.f32 %v127, %v587
    %v589 = vpop.f32.mrf.mxu0
    %v590 = vadd.f32 %v127, %v589
    %591 = vmatprep.mubr.bf16.mxu0 %v503
    %592 = vmatmul.mubr.bf16.gmra.mxu0 %v273
    %v593 = vpop.f32.mrf.mxu0
    %v594 = vadd.f32 %v132, %v593
    %v595 = vpop.f32.mrf.mxu0
    %v596 = vadd.f32 %v132, %v595
    %v597 = vpop.f32.mrf.mxu0
    %v598 = vadd.f32 %v137, %v597
    %v599 = vpop.f32.mrf.mxu0
    %v600 = vadd.f32 %v137, %v599
    %601 = vmatprep.mubr.bf16.mxu0 %v506
    %602 = vmatmul.mubr.bf16.gmra.mxu0 %v275
    %v603 = vpop.f32.mrf.mxu0
    %v604 = vadd.f32 %v142, %v603
    %v605 = vpop.f32.mrf.mxu0
    %v606 = vadd.f32 %v142, %v605
    %v607 = vpop.f32.mrf.mxu0
    %v608 = vadd.f32 %v147, %v607
    %v609 = vpop.f32.mrf.mxu0
    %v610 = vadd.f32 %v147, %v609
    %611 = vmatprep.mubr.bf16.mxu0 %v509
    %612 = vmatmul.mubr.bf16.gmra.mxu0 %v277
    %v613 = vpop.f32.mrf.mxu0
    %v614 = vadd.f32 %v152, %v613
    %v615 = vpop.f32.mrf.mxu0
    %v616 = vadd.f32 %v152, %v615
    %v617 = vpop.f32.mrf.mxu0
    %v618 = vadd.f32 %v157, %v617
    %v619 = vpop.f32.mrf.mxu0
    %v620 = vadd.f32 %v157, %v619
    %621 = vmatprep.mubr.bf16.mxu0 %v512
    %622 = vmatmul.mubr.bf16.gmra.mxu0 %v279
    %v623 = vpop.f32.mrf.mxu0
    %v624 = vadd.f32 %v162, %v623
    %v625 = vpop.f32.mrf.mxu0
    %v626 = vadd.f32 %v162, %v625
    %v627 = vpop.f32.mrf.mxu0
    %v628 = vadd.f32 %v167, %v627
    %v629 = vpop.f32.mrf.mxu0
    %v630 = vadd.f32 %v167, %v629
    %631 = vmatprep.mubr.bf16.mxu0 %v515
    %632 = vmatmul.mubr.bf16.gmra.mxu0 %v281
    %v633 = vpop.f32.mrf.mxu0
    %v634 = vadd.f32 %v172, %v633
    %v635 = vpop.f32.mrf.mxu0
    %v636 = vadd.f32 %v172, %v635
    %v637 = vpop.f32.mrf.mxu0
    %v638 = vadd.f32 %v177, %v637
    %v639 = vpop.f32.mrf.mxu0
    %v640 = vadd.f32 %v177, %v639
    %641 = vmatprep.mubr.bf16.mxu0 %v518
    %642 = vmatmul.mubr.bf16.gmra.mxu0 %v283
    %v643 = vpop.f32.mrf.mxu0
    %v644 = vadd.f32 %v182, %v643
    %v645 = vpop.f32.mrf.mxu0
    %v646 = vadd.f32 %v182, %v645
    %v647 = vpop.f32.mrf.mxu0
    %v648 = vadd.f32 %v187, %v647
    %v649 = vpop.f32.mrf.mxu0
    %v650 = vadd.f32 %v187, %v649
    %651 = vmatprep.mubr.bf16.mxu0 %v521
    %652 = vmatmul.mubr.bf16.gmra.mxu0 %v285
    %v653 = vpop.f32.mrf.mxu0
    %v654 = vadd.f32 %v192, %v653
    %v655 = vpop.f32.mrf.mxu0
    %v656 = vadd.f32 %v192, %v655
    %v657 = vpop.f32.mrf.mxu0
    %v658 = vadd.f32 %v197, %v657
    %v659 = vpop.f32.mrf.mxu0
    %v660 = vadd.f32 %v197, %v659
    %661 = vmatprep.mubr.bf16.mxu0 %v524
    %662 = vmatmul.mubr.bf16.gmra.mxu0 %v287
    %v663 = vpop.f32.mrf.mxu0
    %v664 = vadd.f32 %v202, %v663
    %v665 = vpop.f32.mrf.mxu0
    %v666 = vadd.f32 %v202, %v665
    %v667 = vpop.f32.mrf.mxu0
    %v668 = vadd.f32 %v207, %v667
    %v669 = vpop.f32.mrf.mxu0
    %v670 = vadd.f32 %v207, %v669
    %671 = vdwg.mxu0
    %672 = vmatprep.subr.bf16.mxu0 %v450
    %673 = vmatpush1.bf16.msra.mxu0 %v449
    %674 = vmatprep.subr.bf16.mxu0 %v446
    %675 = vmatpush1.bf16.msra.mxu0 %v445
    %676 = vmatprep.subr.bf16.mxu0 %v442
    %677 = vmatpush1.bf16.msra.mxu0 %v441
    %678 = vmatprep.subr.bf16.mxu0 %v438
    %679 = vmatpush1.bf16.msra.mxu0 %v437
    %680 = vmatprep.subr.bf16.mxu0 %v434
    %681 = vmatpush1.bf16.msra.mxu0 %v433
    %682 = vmatprep.subr.bf16.mxu0 %v430
    %683 = vmatpush1.bf16.msra.mxu0 %v429
    %684 = vmatprep.subr.bf16.mxu0 %v426
    %685 = vmatpush1.bf16.msra.mxu0 %v425
    %686 = vmatprep.subr.bf16.mxu0 %v422
    %687 = vmatpush1.bf16.msra.mxu0 %v421
    %688 = vmatprep.subr.bf16.mxu0 0
    %689 = vmatpush2.bf16.msra.mxu0 0
    %690 = vmatprep.subr.bf16.mxu0 0
    %691 = vmatpush2.bf16.msra.mxu0 0
    %692 = vmatprep.subr.bf16.mxu0 0
    %693 = vmatpush2.bf16.msra.mxu0 0
    %694 = vmatprep.subr.bf16.mxu0 0
    %695 = vmatpush2.bf16.msra.mxu0 0
    %696 = vmatprep.subr.bf16.mxu0 0
    %697 = vmatpush2.bf16.msra.mxu0 0
    %698 = vmatprep.subr.bf16.mxu0 0
    %699 = vmatpush2.bf16.msra.mxu0 0
    %700 = vmatprep.subr.bf16.mxu0 %v537
    %701 = vmatpush2.bf16.msra.mxu0 %v534
    %702 = vmatprep.subr.bf16.mxu0 %v454
    %703 = vmatpush2.bf16.msra.mxu0 %v453
    %704 = vmatprep.mubr.bf16.mxu0 %v497
    %705 = vmatmul.mubr.bf16.gmra.mxu0 %v269
    %v706 = vpop.f32.mrf.mxu0
    %v707 = vadd.f32 %v112, %v706
    %v708 = vpop.f32.mrf.mxu0
    %v709 = vadd.f32 %v112, %v708
    %v710 = vpop.f32.mrf.mxu0
    %v711 = vadd.f32 %v117, %v710
    %v712 = vpop.f32.mrf.mxu0
    %v713 = vadd.f32 %v117, %v712
    %714 = vmatprep.mubr.bf16.mxu0 %v500
    %715 = vmatmul.mubr.bf16.gmra.mxu0 %v271
    %v716 = vpop.f32.mrf.mxu0
    %v717 = vadd.f32 %v122, %v716
    %v718 = vpop.f32.mrf.mxu0
    %v719 = vadd.f32 %v122, %v718
    %v720 = vpop.f32.mrf.mxu0
    %v721 = vadd.f32 %v127, %v720
    %v722 = vpop.f32.mrf.mxu0
    %v723 = vadd.f32 %v127, %v722
    %724 = vmatprep.mubr.bf16.mxu0 %v503
    %725 = vmatmul.mubr.bf16.gmra.mxu0 %v273
    %v726 = vpop.f32.mrf.mxu0
    %v727 = vadd.f32 %v132, %v726
    %v728 = vpop.f32.mrf.mxu0
    %v729 = vadd.f32 %v132, %v728
    %v730 = vpop.f32.mrf.mxu0
    %v731 = vadd.f32 %v137, %v730
    %v732 = vpop.f32.mrf.mxu0
    %v733 = vadd.f32 %v137, %v732
    %734 = vmatprep.mubr.bf16.mxu0 %v506
    %735 = vmatmul.mubr.bf16.gmra.mxu0 %v275
    %v736 = vpop.f32.mrf.mxu0
    %v737 = vadd.f32 %v142, %v736
    %v738 = vpop.f32.mrf.mxu0
    %v739 = vadd.f32 %v142, %v738
    %v740 = vpop.f32.mrf.mxu0
    %v741 = vadd.f32 %v147, %v740
    %v742 = vpop.f32.mrf.mxu0
    %v743 = vadd.f32 %v147, %v742
    %744 = vmatprep.mubr.bf16.mxu0 %v509
    %745 = vmatmul.mubr.bf16.gmra.mxu0 %v277
    %v746 = vpop.f32.mrf.mxu0
    %v747 = vadd.f32 %v152, %v746
    %v748 = vpop.f32.mrf.mxu0
    %v749 = vadd.f32 %v152, %v748
    %v750 = vpop.f32.mrf.mxu0
    %v751 = vadd.f32 %v157, %v750
    %v752 = vpop.f32.mrf.mxu0
    %v753 = vadd.f32 %v157, %v752
    %754 = vmatprep.mubr.bf16.mxu0 %v512
    %755 = vmatmul.mubr.bf16.gmra.mxu0 %v279
    %v756 = vpop.f32.mrf.mxu0
    %v757 = vadd.f32 %v162, %v756
    %v758 = vpop.f32.mrf.mxu0
    %v759 = vadd.f32 %v162, %v758
    %v760 = vpop.f32.mrf.mxu0
    %v761 = vadd.f32 %v167, %v760
    %v762 = vpop.f32.mrf.mxu0
    %v763 = vadd.f32 %v167, %v762
    %764 = vmatprep.mubr.bf16.mxu0 %v515
    %765 = vmatmul.mubr.bf16.gmra.mxu0 %v281
    %v766 = vpop.f32.mrf.mxu0
    %v767 = vadd.f32 %v172, %v766
    %v768 = vpop.f32.mrf.mxu0
    %v769 = vadd.f32 %v172, %v768
    %v770 = vpop.f32.mrf.mxu0
    %v771 = vadd.f32 %v177, %v770
    %v772 = vpop.f32.mrf.mxu0
    %v773 = vadd.f32 %v177, %v772
    %774 = vmatprep.mubr.bf16.mxu0 %v518
    %775 = vmatmul.mubr.bf16.gmra.mxu0 %v283
    %v776 = vpop.f32.mrf.mxu0
    %v777 = vadd.f32 %v182, %v776
    %v778 = vpop.f32.mrf.mxu0
    %v779 = vadd.f32 %v182, %v778
    %v780 = vpop.f32.mrf.mxu0
    %v781 = vadd.f32 %v187, %v780
    %v782 = vpop.f32.mrf.mxu0
    %v783 = vadd.f32 %v187, %v782
    %784 = vmatprep.mubr.bf16.mxu0 %v521
    %785 = vmatmul.mubr.bf16.gmra.mxu0 %v285
    %v786 = vpop.f32.mrf.mxu0
    %v787 = vadd.f32 %v192, %v786
    %v788 = vpop.f32.mrf.mxu0
    %v789 = vadd.f32 %v192, %v788
    %v790 = vpop.f32.mrf.mxu0
    %v791 = vadd.f32 %v197, %v790
    %v792 = vpop.f32.mrf.mxu0
    %v793 = vadd.f32 %v197, %v792
    %794 = vmatprep.mubr.bf16.mxu0 %v524
    %795 = vmatmul.mubr.bf16.gmra.mxu0 %v287
    %v796 = vpop.f32.mrf.mxu0
    %v797 = vadd.f32 %v202, %v796
    %v798 = vpop.f32.mrf.mxu0
    %v799 = vadd.f32 %v202, %v798
    %v800 = vpop.f32.mrf.mxu0
    %v801 = vadd.f32 %v207, %v800
    %v802 = vpop.f32.mrf.mxu0
    %v803 = vadd.f32 %v207, %v802
    %804 = vdwg.mxu0
    %v805 = vxor.u32 %v574, 2147483648
    %v806 = vxor.u32 %v576, 2147483648
    %v807 = vxor.u32 %v707, 2147483648
    %v808 = vxor.u32 %v709, 2147483648
    %v809 = vxor.u32 %v578, 2147483648
    %v810 = vxor.u32 %v580, 2147483648
    %v811 = vxor.u32 %v711, 2147483648
    %v812 = vxor.u32 %v713, 2147483648
    %v813 = vxor.u32 %v584, 2147483648
    %v814 = vxor.u32 %v586, 2147483648
    %v815 = vxor.u32 %v717, 2147483648
    %v816 = vxor.u32 %v719, 2147483648
    %v817 = vxor.u32 %v588, 2147483648
    %v818 = vxor.u32 %v590, 2147483648
    %v819 = vxor.u32 %v721, 2147483648
    %v820 = vxor.u32 %v723, 2147483648
    %v821 = vxor.u32 %v594, 2147483648
    %v822 = vxor.u32 %v596, 2147483648
    %v823 = vxor.u32 %v727, 2147483648
    %v824 = vxor.u32 %v729, 2147483648
    %v825 = vxor.u32 %v598, 2147483648
    %v826 = vxor.u32 %v600, 2147483648
    %v827 = vxor.u32 %v731, 2147483648
    %v828 = vxor.u32 %v733, 2147483648
    %v829 = vxor.u32 %v604, 2147483648
    %v830 = vxor.u32 %v606, 2147483648
    %v831 = vxor.u32 %v737, 2147483648
    %v832 = vxor.u32 %v739, 2147483648
    %v833 = vxor.u32 %v608, 2147483648
    %v834 = vxor.u32 %v610, 2147483648
    %v835 = vxor.u32 %v741, 2147483648
    %v836 = vxor.u32 %v743, 2147483648
    %v837 = vxor.u32 %v614, 2147483648
    %v838 = vxor.u32 %v616, 2147483648
    %v839 = vxor.u32 %v747, 2147483648
    %v840 = vxor.u32 %v749, 2147483648
    %v841 = vxor.u32 %v618, 2147483648
    %v842 = vxor.u32 %v620, 2147483648
    %v843 = vxor.u32 %v751, 2147483648
    %v844 = vxor.u32 %v753, 2147483648
    %v845 = vxor.u32 %v624, 2147483648
    %v846 = vxor.u32 %v626, 2147483648
    %v847 = vxor.u32 %v757, 2147483648
    %v848 = vxor.u32 %v759, 2147483648
    %v849 = vxor.u32 %v628, 2147483648
    %v850 = vxor.u32 %v630, 2147483648
    %v851 = vxor.u32 %v761, 2147483648
    %v852 = vxor.u32 %v763, 2147483648
    %v853 = vxor.u32 %v634, 2147483648
    %v854 = vxor.u32 %v636, 2147483648
    %v855 = vxor.u32 %v767, 2147483648
    %v856 = vxor.u32 %v769, 2147483648
    %v857 = vxor.u32 %v638, 2147483648
    %v858 = vxor.u32 %v640, 2147483648
    %v859 = vxor.u32 %v771, 2147483648
    %v860 = vxor.u32 %v773, 2147483648
    %v861 = vxor.u32 %v644, 2147483648
    %v862 = vxor.u32 %v646, 2147483648
    %v863 = vxor.u32 %v777, 2147483648
    %v864 = vxor.u32 %v779, 2147483648
    %v865 = vxor.u32 %v648, 2147483648
    %v866 = vxor.u32 %v650, 2147483648
    %v867 = vxor.u32 %v781, 2147483648
    %v868 = vxor.u32 %v783, 2147483648
    %v869 = vxor.u32 %v654, 2147483648
    %v870 = vxor.u32 %v656, 2147483648
    %v871 = vxor.u32 %v787, 2147483648
    %v872 = vxor.u32 %v789, 2147483648
    %v873 = vxor.u32 %v658, 2147483648
    %v874 = vxor.u32 %v660, 2147483648
    %v875 = vxor.u32 %v791, 2147483648
    %v876 = vxor.u32 %v793, 2147483648
    %v877 = vxor.u32 %v664, 2147483648
    %v878 = vxor.u32 %v666, 2147483648
    %v879 = vxor.u32 %v797, 2147483648
    %v880 = vxor.u32 %v799, 2147483648
    %v881 = vxor.u32 %v668, 2147483648
    %v882 = vxor.u32 %v670, 2147483648
    %v883 = vxor.u32 %v801, 2147483648
    %v884 = vxor.u32 %v803, 2147483648
    %v885 = vmul.f32 %v805, 1.442695
    %v886 = vpow.pop %v885
    %v887 = vmul.f32 %v806, 1.442695
    %v888 = vpow.pop %v887
    %v889 = vmul.f32 %v807, 1.442695
    %v890 = vpow.pop %v889
    %v891 = vmul.f32 %v808, 1.442695
    %v892 = vpow.pop %v891
    %v893 = vmul.f32 %v809, 1.442695
    %v894 = vpow.pop %v893
    %v895 = vmul.f32 %v810, 1.442695
    %v896 = vpow.pop %v895
    %v897 = vmul.f32 %v811, 1.442695
    %v898 = vpow.pop %v897
    %v899 = vmul.f32 %v812, 1.442695
    %v900 = vpow.pop %v899
    %v901 = vmul.f32 %v813, 1.442695
    %v902 = vpow.pop %v901
    %v903 = vmul.f32 %v814, 1.442695
    %v904 = vpow.pop %v903
    %v905 = vmul.f32 %v815, 1.442695
    %v906 = vpow.pop %v905
    %v907 = vmul.f32 %v816, 1.442695
    %v908 = vpow.pop %v907
    %v909 = vmul.f32 %v817, 1.442695
    %v910 = vpow.pop %v909
    %v911 = vmul.f32 %v818, 1.442695
    %v912 = vpow.pop %v911
    %v913 = vmul.f32 %v819, 1.442695
    %v914 = vpow.pop %v913
    %v915 = vmul.f32 %v820, 1.442695
    %v916 = vpow.pop %v915
    %v917 = vmul.f32 %v821, 1.442695
    %v918 = vpow.pop %v917
    %v919 = vmul.f32 %v822, 1.442695
    %v920 = vpow.pop %v919
    %v921 = vmul.f32 %v823, 1.442695
    %v922 = vpow.pop %v921
    %v923 = vmul.f32 %v824, 1.442695
    %v924 = vpow.pop %v923
    %v925 = vmul.f32 %v825, 1.442695
    %v926 = vpow.pop %v925
    %v927 = vmul.f32 %v826, 1.442695
    %v928 = vpow.pop %v927
    %v929 = vmul.f32 %v827, 1.442695
    %v930 = vpow.pop %v929
    %v931 = vmul.f32 %v828, 1.442695
    %v932 = vpow.pop %v931
    %v933 = vmul.f32 %v829, 1.442695
    %v934 = vpow.pop %v933
    %v935 = vmul.f32 %v830, 1.442695
    %v936 = vpow.pop %v935
    %v937 = vmul.f32 %v831, 1.442695
    %v938 = vpow.pop %v937
    %v939 = vmul.f32 %v832, 1.442695
    %v940 = vpow.pop %v939
    %v941 = vmul.f32 %v833, 1.442695
    %v942 = vpow.pop %v941
    %v943 = vmul.f32 %v834, 1.442695
    %v944 = vpow.pop %v943
    %v945 = vmul.f32 %v835, 1.442695
    %v946 = vpow.pop %v945
    %v947 = vmul.f32 %v836, 1.442695
    %v948 = vpow.pop %v947
    %v949 = vmul.f32 %v837, 1.442695
    %v950 = vpow.pop %v949
    %v951 = vmul.f32 %v838, 1.442695
    %v952 = vpow.pop %v951
    %v953 = vmul.f32 %v839, 1.442695
    %v954 = vpow.pop %v953
    %v955 = vmul.f32 %v840, 1.442695
    %v956 = vpow.pop %v955
    %v957 = vmul.f32 %v841, 1.442695
    %v958 = vpow.pop %v957
    %v959 = vmul.f32 %v842, 1.442695
    %v960 = vpow.pop %v959
    %v961 = vmul.f32 %v843, 1.442695
    %v962 = vpow.pop %v961
    %v963 = vmul.f32 %v844, 1.442695
    %v964 = vpow.pop %v963
    %v965 = vmul.f32 %v845, 1.442695
    %v966 = vpow.pop %v965
    %v967 = vmul.f32 %v846, 1.442695
    %v968 = vpow.pop %v967
    %v969 = vmul.f32 %v847, 1.442695
    %v970 = vpow.pop %v969
    %v971 = vmul.f32 %v848, 1.442695
    %v972 = vpow.pop %v971
    %v973 = vmul.f32 %v849, 1.442695
    %v974 = vpow.pop %v973
    %v975 = vmul.f32 %v850, 1.442695
    %v976 = vpow.pop %v975
    %v977 = vmul.f32 %v851, 1.442695
    %v978 = vpow.pop %v977
    %v979 = vmul.f32 %v852, 1.442695
    %v980 = vpow.pop %v979
    %v981 = vmul.f32 %v853, 1.442695
    %v982 = vpow.pop %v981
    %v983 = vmul.f32 %v854, 1.442695
    %v984 = vpow.pop %v983
    %v985 = vmul.f32 %v855, 1.442695
    %v986 = vpow.pop %v985
    %v987 = vmul.f32 %v856, 1.442695
    %v988 = vpow.pop %v987
    %v989 = vmul.f32 %v857, 1.442695
    %v990 = vpow.pop %v989
    %v991 = vmul.f32 %v858, 1.442695
    %v992 = vpow.pop %v991
    %v993 = vmul.f32 %v859, 1.442695
    %v994 = vpow.pop %v993
    %v995 = vmul.f32 %v860, 1.442695
    %v996 = vpow.pop %v995
    %v997 = vmul.f32 %v861, 1.442695
    %v998 = vpow.pop %v997
    %v999 = vmul.f32 %v862, 1.442695
    %v1000 = vpow.pop %v999
    %v1001 = vmul.f32 %v863, 1.442695
    %v1002 = vpow.pop %v1001
    %v1003 = vmul.f32 %v864, 1.442695
    %v1004 = vpow.pop %v1003
    %v1005 = vmul.f32 %v865, 1.442695
    %v1006 = vpow.pop %v1005
    %v1007 = vmul.f32 %v866, 1.442695
    %v1008 = vpow.pop %v1007
    %v1009 = vmul.f32 %v867, 1.442695
    %v1010 = vpow.pop %v1009
    %v1011 = vmul.f32 %v868, 1.442695
    %v1012 = vpow.pop %v1011
    %v1013 = vmul.f32 %v869, 1.442695
    %v1014 = vpow.pop %v1013
    %v1015 = vmul.f32 %v870, 1.442695
    %v1016 = vpow.pop %v1015
    %v1017 = vmul.f32 %v871, 1.442695
    %v1018 = vpow.pop %v1017
    %v1019 = vmul.f32 %v872, 1.442695
    %v1020 = vpow.pop %v1019
    %v1021 = vmul.f32 %v873, 1.442695
    %v1022 = vpow.pop %v1021
    %v1023 = vmul.f32 %v874, 1.442695
    %v1024 = vpow.pop %v1023
    %v1025 = vmul.f32 %v875, 1.442695
    %v1026 = vpow.pop %v1025
    %v1027 = vmul.f32 %v876, 1.442695
    %v1028 = vpow.pop %v1027
    %v1029 = vmul.f32 %v877, 1.442695
    %v1030 = vpow.pop %v1029
    %v1031 = vmul.f32 %v878, 1.442695
    %v1032 = vpow.pop %v1031
    %v1033 = vmul.f32 %v879, 1.442695
    %v1034 = vpow.pop %v1033
    %v1035 = vmul.f32 %v880, 1.442695
    %v1036 = vpow.pop %v1035
    %v1037 = vmul.f32 %v881, 1.442695
    %v1038 = vpow.pop %v1037
    %v1039 = vmul.f32 %v882, 1.442695
    %v1040 = vpow.pop %v1039
    %v1041 = vmul.f32 %v883, 1.442695
    %v1042 = vpow.pop %v1041
    %v1043 = vmul.f32 %v884, 1.442695
    %v1044 = vpow.pop %v1043
    %v1045 = vadd.f32 %v886, 1.0
    %v1046 = vadd.f32 %v888, 1.0
    %v1047 = vadd.f32 %v890, 1.0
    %v1048 = vadd.f32 %v892, 1.0
    %v1049 = vadd.f32 %v894, 1.0
    %v1050 = vadd.f32 %v896, 1.0
    %v1051 = vadd.f32 %v898, 1.0
    %v1052 = vadd.f32 %v900, 1.0
    %v1053 = vadd.f32 %v902, 1.0
    %v1054 = vadd.f32 %v904, 1.0
    %v1055 = vadd.f32 %v906, 1.0
    %v1056 = vadd.f32 %v908, 1.0
    %v1057 = vadd.f32 %v910, 1.0
    %v1058 = vadd.f32 %v912, 1.0
    %v1059 = vadd.f32 %v914, 1.0
    %v1060 = vadd.f32 %v916, 1.0
    %v1061 = vadd.f32 %v918, 1.0
    %v1062 = vadd.f32 %v920, 1.0
    %v1063 = vadd.f32 %v922, 1.0
    %v1064 = vadd.f32 %v924, 1.0
    %v1065 = vadd.f32 %v926, 1.0
    %v1066 = vadd.f32 %v928, 1.0
    %v1067 = vadd.f32 %v930, 1.0
    %v1068 = vadd.f32 %v932, 1.0
    %v1069 = vadd.f32 %v934, 1.0
    %v1070 = vadd.f32 %v936, 1.0
    %v1071 = vadd.f32 %v938, 1.0
    %v1072 = vadd.f32 %v940, 1.0
    %v1073 = vadd.f32 %v942, 1.0
    %v1074 = vadd.f32 %v944, 1.0
    %v1075 = vadd.f32 %v946, 1.0
    %v1076 = vadd.f32 %v948, 1.0
    %v1077 = vadd.f32 %v950, 1.0
    %v1078 = vadd.f32 %v952, 1.0
    %v1079 = vadd.f32 %v954, 1.0
    %v1080 = vadd.f32 %v956, 1.0
    %v1081 = vadd.f32 %v958, 1.0
    %v1082 = vadd.f32 %v960, 1.0
    %v1083 = vadd.f32 %v962, 1.0
    %v1084 = vadd.f32 %v964, 1.0
    %v1085 = vadd.f32 %v966, 1.0
    %v1086 = vadd.f32 %v968, 1.0
    %v1087 = vadd.f32 %v970, 1.0
    %v1088 = vadd.f32 %v972, 1.0
    %v1089 = vadd.f32 %v974, 1.0
    %v1090 = vadd.f32 %v976, 1.0
    %v1091 = vadd.f32 %v978, 1.0
    %v1092 = vadd.f32 %v980, 1.0
    %v1093 = vadd.f32 %v982, 1.0
    %v1094 = vadd.f32 %v984, 1.0
    %v1095 = vadd.f32 %v986, 1.0
    %v1096 = vadd.f32 %v988, 1.0
    %v1097 = vadd.f32 %v990, 1.0
    %v1098 = vadd.f32 %v992, 1.0
    %v1099 = vadd.f32 %v994, 1.0
    %v1100 = vadd.f32 %v996, 1.0
    %v1101 = vadd.f32 %v998, 1.0
    %v1102 = vadd.f32 %v1000, 1.0
    %v1103 = vadd.f32 %v1002, 1.0
    %v1104 = vadd.f32 %v1004, 1.0
    %v1105 = vadd.f32 %v1006, 1.0
    %v1106 = vadd.f32 %v1008, 1.0
    %v1107 = vadd.f32 %v1010, 1.0
    %v1108 = vadd.f32 %v1012, 1.0
    %v1109 = vadd.f32 %v1014, 1.0
    %v1110 = vadd.f32 %v1016, 1.0
    %v1111 = vadd.f32 %v1018, 1.0
    %v1112 = vadd.f32 %v1020, 1.0
    %v1113 = vadd.f32 %v1022, 1.0
    %v1114 = vadd.f32 %v1024, 1.0
    %v1115 = vadd.f32 %v1026, 1.0
    %v1116 = vadd.f32 %v1028, 1.0
    %v1117 = vadd.f32 %v1030, 1.0
    %v1118 = vadd.f32 %v1032, 1.0
    %v1119 = vadd.f32 %v1034, 1.0
    %v1120 = vadd.f32 %v1036, 1.0
    %v1121 = vadd.f32 %v1038, 1.0
    %v1122 = vadd.f32 %v1040, 1.0
    %v1123 = vadd.f32 %v1042, 1.0
    %v1124 = vadd.f32 %v1044, 1.0
    %v1125 = vrcp.pop %v1045
    %v1126 = vmul.f32 1.0, %v1125
    %v1127 = vrcp.pop %v1046
    %v1128 = vmul.f32 1.0, %v1127
    %v1129 = vrcp.pop %v1047
    %v1130 = vmul.f32 1.0, %v1129
    %v1131 = vrcp.pop %v1048
    %v1132 = vmul.f32 1.0, %v1131
    %v1133 = vrcp.pop %v1049
    %v1134 = vmul.f32 1.0, %v1133
    %v1135 = vrcp.pop %v1050
    %v1136 = vmul.f32 1.0, %v1135
    %v1137 = vrcp.pop %v1051
    %v1138 = vmul.f32 1.0, %v1137
    %v1139 = vrcp.pop %v1052
    %v1140 = vmul.f32 1.0, %v1139
    %v1141 = vrcp.pop %v1053
    %v1142 = vmul.f32 1.0, %v1141
    %v1143 = vrcp.pop %v1054
    %v1144 = vmul.f32 1.0, %v1143
    %v1145 = vrcp.pop %v1055
    %v1146 = vmul.f32 1.0, %v1145
    %v1147 = vrcp.pop %v1056
    %v1148 = vmul.f32 1.0, %v1147
    %v1149 = vrcp.pop %v1057
    %v1150 = vmul.f32 1.0, %v1149
    %v1151 = vrcp.pop %v1058
    %v1152 = vmul.f32 1.0, %v1151
    %v1153 = vrcp.pop %v1059
    %v1154 = vmul.f32 1.0, %v1153
    %v1155 = vrcp.pop %v1060
    %v1156 = vmul.f32 1.0, %v1155
    %v1157 = vrcp.pop %v1061
    %v1158 = vmul.f32 1.0, %v1157
    %v1159 = vrcp.pop %v1062
    %v1160 = vmul.f32 1.0, %v1159
    %v1161 = vrcp.pop %v1063
    %v1162 = vmul.f32 1.0, %v1161
    %v1163 = vrcp.pop %v1064
    %v1164 = vmul.f32 1.0, %v1163
    %v1165 = vrcp.pop %v1065
    %v1166 = vmul.f32 1.0, %v1165
    %v1167 = vrcp.pop %v1066
    %v1168 = vmul.f32 1.0, %v1167
    %v1169 = vrcp.pop %v1067
    %v1170 = vmul.f32 1.0, %v1169
    %v1171 = vrcp.pop %v1068
    %v1172 = vmul.f32 1.0, %v1171
    %v1173 = vrcp.pop %v1069
    %v1174 = vmul.f32 1.0, %v1173
    %v1175 = vrcp.pop %v1070
    %v1176 = vmul.f32 1.0, %v1175
    %v1177 = vrcp.pop %v1071
    %v1178 = vmul.f32 1.0, %v1177
    %v1179 = vrcp.pop %v1072
    %v1180 = vmul.f32 1.0, %v1179
    %v1181 = vrcp.pop %v1073
    %v1182 = vmul.f32 1.0, %v1181
    %v1183 = vrcp.pop %v1074
    %v1184 = vmul.f32 1.0, %v1183
    %v1185 = vrcp.pop %v1075
    %v1186 = vmul.f32 1.0, %v1185
    %v1187 = vrcp.pop %v1076
    %v1188 = vmul.f32 1.0, %v1187
    %v1189 = vrcp.pop %v1077
    %v1190 = vmul.f32 1.0, %v1189
    %v1191 = vrcp.pop %v1078
    %v1192 = vmul.f32 1.0, %v1191
    %v1193 = vrcp.pop %v1079
    %v1194 = vmul.f32 1.0, %v1193
    %v1195 = vrcp.pop %v1080
    %v1196 = vmul.f32 1.0, %v1195
    %v1197 = vrcp.pop %v1081
    %v1198 = vmul.f32 1.0, %v1197
    %v1199 = vrcp.pop %v1082
    %v1200 = vmul.f32 1.0, %v1199
    %v1201 = vrcp.pop %v1083
    %v1202 = vmul.f32 1.0, %v1201
    %v1203 = vrcp.pop %v1084
    %v1204 = vmul.f32 1.0, %v1203
    %v1205 = vrcp.pop %v1085
    %v1206 = vmul.f32 1.0, %v1205
    %v1207 = vrcp.pop %v1086
    %v1208 = vmul.f32 1.0, %v1207
    %v1209 = vrcp.pop %v1087
    %v1210 = vmul.f32 1.0, %v1209
    %v1211 = vrcp.pop %v1088
    %v1212 = vmul.f32 1.0, %v1211
    %v1213 = vrcp.pop %v1089
    %v1214 = vmul.f32 1.0, %v1213
    %v1215 = vrcp.pop %v1090
    %v1216 = vmul.f32 1.0, %v1215
    %v1217 = vrcp.pop %v1091
    %v1218 = vmul.f32 1.0, %v1217
    %v1219 = vrcp.pop %v1092
    %v1220 = vmul.f32 1.0, %v1219
    %v1221 = vrcp.pop %v1093
    %v1222 = vmul.f32 1.0, %v1221
    %v1223 = vrcp.pop %v1094
    %v1224 = vmul.f32 1.0, %v1223
    %v1225 = vrcp.pop %v1095
    %v1226 = vmul.f32 1.0, %v1225
    %v1227 = vrcp.pop %v1096
    %v1228 = vmul.f32 1.0, %v1227
    %v1229 = vrcp.pop %v1097
    %v1230 = vmul.f32 1.0, %v1229
    %v1231 = vrcp.pop %v1098
    %v1232 = vmul.f32 1.0, %v1231
    %v1233 = vrcp.pop %v1099
    %v1234 = vmul.f32 1.0, %v1233
    %v1235 = vrcp.pop %v1100
    %v1236 = vmul.f32 1.0, %v1235
    %v1237 = vrcp.pop %v1101
    %v1238 = vmul.f32 1.0, %v1237
    %v1239 = vrcp.pop %v1102
    %v1240 = vmul.f32 1.0, %v1239
    %v1241 = vrcp.pop %v1103
    %v1242 = vmul.f32 1.0, %v1241
    %v1243 = vrcp.pop %v1104
    %v1244 = vmul.f32 1.0, %v1243
    %v1245 = vrcp.pop %v1105
    %v1246 = vmul.f32 1.0, %v1245
    %v1247 = vrcp.pop %v1106
    %v1248 = vmul.f32 1.0, %v1247
    %v1249 = vrcp.pop %v1107
    %v1250 = vmul.f32 1.0, %v1249
    %v1251 = vrcp.pop %v1108
    %v1252 = vmul.f32 1.0, %v1251
    %v1253 = vrcp.pop %v1109
    %v1254 = vmul.f32 1.0, %v1253
    %v1255 = vrcp.pop %v1110
    %v1256 = vmul.f32 1.0, %v1255
    %v1257 = vrcp.pop %v1111
    %v1258 = vmul.f32 1.0, %v1257
    %v1259 = vrcp.pop %v1112
    %v1260 = vmul.f32 1.0, %v1259
    %v1261 = vrcp.pop %v1113
    %v1262 = vmul.f32 1.0, %v1261
    %v1263 = vrcp.pop %v1114
    %v1264 = vmul.f32 1.0, %v1263
    %v1265 = vrcp.pop %v1115
    %v1266 = vmul.f32 1.0, %v1265
    %v1267 = vrcp.pop %v1116
    %v1268 = vmul.f32 1.0, %v1267
    %v1269 = vrcp.pop %v1117
    %v1270 = vmul.f32 1.0, %v1269
    %v1271 = vrcp.pop %v1118
    %v1272 = vmul.f32 1.0, %v1271
    %v1273 = vrcp.pop %v1119
    %v1274 = vmul.f32 1.0, %v1273
    %v1275 = vrcp.pop %v1120
    %v1276 = vmul.f32 1.0, %v1275
    %v1277 = vrcp.pop %v1121
    %v1278 = vmul.f32 1.0, %v1277
    %v1279 = vrcp.pop %v1122
    %v1280 = vmul.f32 1.0, %v1279
    %v1281 = vrcp.pop %v1123
    %v1282 = vmul.f32 1.0, %v1281
    %v1283 = vrcp.pop %v1124
    %v1284 = vmul.f32 1.0, %v1283
    %v1285 = vmul.f32 %v574, %v1126
    %v1286 = vmul.f32 %v576, %v1128
    %v1287 = vmul.f32 %v707, %v1130
    %v1288 = vmul.f32 %v709, %v1132
    %v1289 = vmul.f32 %v578, %v1134
    %v1290 = vmul.f32 %v580, %v1136
    %v1291 = vmul.f32 %v711, %v1138
    %v1292 = vmul.f32 %v713, %v1140
    %v1293 = vmul.f32 %v584, %v1142
    %v1294 = vmul.f32 %v586, %v1144
    %v1295 = vmul.f32 %v717, %v1146
    %v1296 = vmul.f32 %v719, %v1148
    %v1297 = vmul.f32 %v588, %v1150
    %v1298 = vmul.f32 %v590, %v1152
    %v1299 = vmul.f32 %v721, %v1154
    %v1300 = vmul.f32 %v723, %v1156
    %v1301 = vmul.f32 %v594, %v1158
    %v1302 = vmul.f32 %v596, %v1160
    %v1303 = vmul.f32 %v727, %v1162
    %v1304 = vmul.f32 %v729, %v1164
    %v1305 = vmul.f32 %v598, %v1166
    %v1306 = vmul.f32 %v600, %v1168
    %v1307 = vmul.f32 %v731, %v1170
    %v1308 = vmul.f32 %v733, %v1172
    %v1309 = vmul.f32 %v604, %v1174
    %v1310 = vmul.f32 %v606, %v1176
    %v1311 = vmul.f32 %v737, %v1178
    %v1312 = vmul.f32 %v739, %v1180
    %v1313 = vmul.f32 %v608, %v1182
    %v1314 = vmul.f32 %v610, %v1184
    %v1315 = vmul.f32 %v741, %v1186
    %v1316 = vmul.f32 %v743, %v1188
    %v1317 = vmul.f32 %v614, %v1190
    %v1318 = vmul.f32 %v616, %v1192
    %v1319 = vmul.f32 %v747, %v1194
    %v1320 = vmul.f32 %v749, %v1196
    %v1321 = vmul.f32 %v618, %v1198
    %v1322 = vmul.f32 %v620, %v1200
    %v1323 = vmul.f32 %v751, %v1202
    %v1324 = vmul.f32 %v753, %v1204
    %v1325 = vmul.f32 %v624, %v1206
    %v1326 = vmul.f32 %v626, %v1208
    %v1327 = vmul.f32 %v757, %v1210
    %v1328 = vmul.f32 %v759, %v1212
    %v1329 = vmul.f32 %v628, %v1214
    %v1330 = vmul.f32 %v630, %v1216
    %v1331 = vmul.f32 %v761, %v1218
    %v1332 = vmul.f32 %v763, %v1220
    %v1333 = vmul.f32 %v634, %v1222
    %v1334 = vmul.f32 %v636, %v1224
    %v1335 = vmul.f32 %v767, %v1226
    %v1336 = vmul.f32 %v769, %v1228
    %v1337 = vmul.f32 %v638, %v1230
    %v1338 = vmul.f32 %v640, %v1232
    %v1339 = vmul.f32 %v771, %v1234
    %v1340 = vmul.f32 %v773, %v1236
    %v1341 = vmul.f32 %v644, %v1238
    %v1342 = vmul.f32 %v646, %v1240
    %v1343 = vmul.f32 %v777, %v1242
    %v1344 = vmul.f32 %v779, %v1244
    %v1345 = vmul.f32 %v648, %v1246
    %v1346 = vmul.f32 %v650, %v1248
    %v1347 = vmul.f32 %v781, %v1250
    %v1348 = vmul.f32 %v783, %v1252
    %v1349 = vmul.f32 %v654, %v1254
    %v1350 = vmul.f32 %v656, %v1256
    %v1351 = vmul.f32 %v787, %v1258
    %v1352 = vmul.f32 %v789, %v1260
    %v1353 = vmul.f32 %v658, %v1262
    %v1354 = vmul.f32 %v660, %v1264
    %v1355 = vmul.f32 %v791, %v1266
    %v1356 = vmul.f32 %v793, %v1268
    %v1357 = vmul.f32 %v664, %v1270
    %v1358 = vmul.f32 %v666, %v1272
    %v1359 = vmul.f32 %v797, %v1274
    %v1360 = vmul.f32 %v799, %v1276
    %v1361 = vmul.f32 %v668, %v1278
    %v1362 = vmul.f32 %v670, %v1280
    %v1363 = vmul.f32 %v801, %v1282
    %v1364 = vmul.f32 %v803, %v1284
    %1365 = vst [vmem:[%s3] sm:$0xff] %v1285
    %1366 = vst [vmem:[%s3 + $0x8] sm:$0xff] %v1286
    %1367 = vst [vmem:[%s3 + $0x10] sm:$0xff] %v1287
    %vm1368 = vcmask 818176
    %1369 = vst.msk [vmem:[%s3 + $0x18] sm:$0xff] %vm1368, %v1288
    %1370 = vst [vmem:[%s3 + $0x20] sm:$0xff] %v1289
    %1371 = vst [vmem:[%s3 + $0x28] sm:$0xff] %v1290
    %1372 = vst [vmem:[%s3 + $0x30] sm:$0xff] %v1291
    %1373 = vst.msk [vmem:[%s3 + $0x38] sm:$0xff] %vm1368, %v1292
    %1374 = vst [vmem:[%s3 + $0x40] sm:$0xff] %v1293
    %1375 = vst [vmem:[%s3 + $0x48] sm:$0xff] %v1294
    %1376 = vst [vmem:[%s3 + $0x50] sm:$0xff] %v1295
    %1377 = vst.msk [vmem:[%s3 + $0x58] sm:$0xff] %vm1368, %v1296
    %1378 = vst [vmem:[%s3 + $0x60] sm:$0xff] %v1297
    %1379 = vst [vmem:[%s3 + $0x68] sm:$0xff] %v1298
    %1380 = vst [vmem:[%s3 + $0x70] sm:$0xff] %v1299
    %1381 = vst.msk [vmem:[%s3 + $0x78] sm:$0xff] %vm1368, %v1300
    %1382 = vst [vmem:[%s3 + $0x80] sm:$0xff] %v1301
    %1383 = vst [vmem:[%s3 + $0x88] sm:$0xff] %v1302
    %1384 = vst [vmem:[%s3 + $0x90] sm:$0xff] %v1303
    %1385 = vst.msk [vmem:[%s3 + $0x98] sm:$0xff] %vm1368, %v1304
    %1386 = vst [vmem:[%s3 + $0xa0] sm:$0xff] %v1305
    %1387 = vst [vmem:[%s3 + $0xa8] sm:$0xff] %v1306
    %1388 = vst [vmem:[%s3 + $0xb0] sm:$0xff] %v1307
    %1389 = vst.msk [vmem:[%s3 + $0xb8] sm:$0xff] %vm1368, %v1308
    %1390 = vst [vmem:[%s3 + $0xc0] sm:$0xff] %v1309
    %1391 = vst [vmem:[%s3 + $0xc8] sm:$0xff] %v1310
    %1392 = vst [vmem:[%s3 + $0xd0] sm:$0xff] %v1311
    %1393 = vst.msk [vmem:[%s3 + $0xd8] sm:$0xff] %vm1368, %v1312
    %1394 = vst [vmem:[%s3 + $0xe0] sm:$0xff] %v1313
    %1395 = vst [vmem:[%s3 + $0xe8] sm:$0xff] %v1314
    %1396 = vst [vmem:[%s3 + $0xf0] sm:$0xff] %v1315
    %1397 = vst.msk [vmem:[%s3 + $0xf8] sm:$0xff] %vm1368, %v1316
    %1398 = vst [vmem:[%s3 + $0x100] sm:$0xff] %v1317
    %1399 = vst [vmem:[%s3 + $0x108] sm:$0xff] %v1318
    %1400 = vst [vmem:[%s3 + $0x110] sm:$0xff] %v1319
    %1401 = vst.msk [vmem:[%s3 + $0x118] sm:$0xff] %vm1368, %v1320
    %1402 = vst [vmem:[%s3 + $0x120] sm:$0xff] %v1321
    %1403 = vst [vmem:[%s3 + $0x128] sm:$0xff] %v1322
    %1404 = vst [vmem:[%s3 + $0x130] sm:$0xff] %v1323
    %1405 = vst.msk [vmem:[%s3 + $0x138] sm:$0xff] %vm1368, %v1324
    %1406 = vst [vmem:[%s3 + $0x140] sm:$0xff] %v1325
    %1407 = vst [vmem:[%s3 + $0x148] sm:$0xff] %v1326
    %1408 = vst [vmem:[%s3 + $0x150] sm:$0xff] %v1327
    %1409 = vst.msk [vmem:[%s3 + $0x158] sm:$0xff] %vm1368, %v1328
    %1410 = vst [vmem:[%s3 + $0x160] sm:$0xff] %v1329
    %1411 = vst [vmem:[%s3 + $0x168] sm:$0xff] %v1330
    %1412 = vst [vmem:[%s3 + $0x170] sm:$0xff] %v1331
    %1413 = vst.msk [vmem:[%s3 + $0x178] sm:$0xff] %vm1368, %v1332
    %1414 = vst [vmem:[%s3 + $0x180] sm:$0xff] %v1333
    %1415 = vst [vmem:[%s3 + $0x188] sm:$0xff] %v1334
    %1416 = vst [vmem:[%s3 + $0x190] sm:$0xff] %v1335
    %1417 = vst.msk [vmem:[%s3 + $0x198] sm:$0xff] %vm1368, %v1336
    %1418 = vst [vmem:[%s3 + $0x1a0] sm:$0xff] %v1337
    %1419 = vst [vmem:[%s3 + $0x1a8] sm:$0xff] %v1338
    %1420 = vst [vmem:[%s3 + $0x1b0] sm:$0xff] %v1339
    %1421 = vst.msk [vmem:[%s3 + $0x1b8] sm:$0xff] %vm1368, %v1340
    %1422 = vst [vmem:[%s3 + $0x1c0] sm:$0xff] %v1341
    %1423 = vst [vmem:[%s3 + $0x1c8] sm:$0xff] %v1342
    %1424 = vst [vmem:[%s3 + $0x1d0] sm:$0xff] %v1343
    %1425 = vst.msk [vmem:[%s3 + $0x1d8] sm:$0xff] %vm1368, %v1344
    %1426 = vst [vmem:[%s3 + $0x1e0] sm:$0xff] %v1345
    %1427 = vst [vmem:[%s3 + $0x1e8] sm:$0xff] %v1346
    %1428 = vst [vmem:[%s3 + $0x1f0] sm:$0xff] %v1347
    %1429 = vst.msk [vmem:[%s3 + $0x1f8] sm:$0xff] %vm1368, %v1348
    %1430 = vst [vmem:[%s3 + $0x200] sm:$0xff] %v1349
    %1431 = vst [vmem:[%s3 + $0x208] sm:$0xff] %v1350
    %1432 = vst [vmem:[%s3 + $0x210] sm:$0xff] %v1351
    %1433 = vst.msk [vmem:[%s3 + $0x218] sm:$0xff] %vm1368, %v1352
    %1434 = vst [vmem:[%s3 + $0x220] sm:$0xff] %v1353
    %1435 = vst [vmem:[%s3 + $0x228] sm:$0xff] %v1354
    %1436 = vst [vmem:[%s3 + $0x230] sm:$0xff] %v1355
    %1437 = vst.msk [vmem:[%s3 + $0x238] sm:$0xff] %vm1368, %v1356
    %1438 = vst [vmem:[%s3 + $0x240] sm:$0xff] %v1357
    %1439 = vst [vmem:[%s3 + $0x248] sm:$0xff] %v1358
    %1440 = vst [vmem:[%s3 + $0x250] sm:$0xff] %v1359
    %1441 = vst.msk [vmem:[%s3 + $0x258] sm:$0xff] %vm1368, %v1360
    %1442 = vst [vmem:[%s3 + $0x260] sm:$0x3] %v1361
    %1443 = vst [vmem:[%s3 + $0x268] sm:$0x3] %v1362
    %1444 = vst [vmem:[%s3 + $0x270] sm:$0x3] %v1363
    %vm1445 = vcmask 812032
    %1446 = vst.msk [vmem:[%s3 + $0x278] sm:$0x3] %vm1445, %v1364
    // Predicated region
    $region18: #{tpu_custom_call.1} parent=1 // pred_check
      _
    $region19: #{tpu_custom_call.1} parent=1 // pred_check_branch
      %1448 = sbr.rel (0) target = $region21
    $region20: #{tpu_custom_call.1} parent=1 // pred_region
      _
    $region21: #{tpu_custom_call.1} parent=1 // pred_fallthru
      _
    // Predicated region
    $region22: #{tpu_custom_call.1} parent=1 // pred_check
      _
    $region23: #{tpu_custom_call.1} parent=1 // pred_check_branch
      %1450 = sbr.rel (0) target = $region25
    $region24: #{tpu_custom_call.1} parent=1 // pred_region
      _
    $region25: #{tpu_custom_call.1} parent=1 // pred_fallthru
      _
    %1451 = vsyncpa [#allocation3], 1

</llo_original>
